<compile_context>
chip_gen: v5e
topology: v5e:2x2
jax: 0.10.0
libtpu: 0.0.40
codegen_flags: <defaults>
</compile_context>

<pallas_src>
import jax
import jax.numpy as jnp
from jax.experimental import pallas as pl
from jax.experimental.pallas import tpu as pltpu

# ---------------- model hyper-parameters (small synthetic sizes) -------------
B_GRAPHS = 8        # graphs in the batch
N_NODES = 16        # number of graph nodes (src == dst node set per block)
INPUT_SIZE = 16     # input feature size
HIDDEN_SIZE = 32    # hidden size
LABELS_NUM = 8      # output labels
NUM_GCN = 2         # number of GCN layers
RESIDUAL = True
OUT_PAD = 128       # lane-dense padded output width (sliced back in wrapper)

NUM_CHUNKS = 1      # 1 on v5e/v6e (single TC); 2 on v7x to use both TCs
GRAPHS_PER_CHUNK = B_GRAPHS // NUM_CHUNKS
ROWS = GRAPHS_PER_CHUNK * N_NODES          # batch-stacked node rows per chunk


def gcn_kernel(x_ref, adj_ref, w_in_ref, b_in_ref,
               w_ppi_ref, b_ppi_ref, w_out_ref, b_out_ref,
               out_ref):
    """Full GCN forward for one chunk of batch-stacked graphs (in VMEM)."""
    x = x_ref[0]                                                    # [ROWS, In] bf16

    # h = relu(input(inputs) + input_bias)   (input_bias pre-folded into b_in)
    h = jnp.dot(x, w_in_ref[...], preferred_element_type=jnp.float32)
    h = jnp.maximum(h + b_in_ref[...], 0.0)                         # [ROWS, H] f32

    # GCN layers (static unrolled loop — NUM_GCN is a compile-time constant)
    for i in range(NUM_GCN):
        hb = h.astype(jnp.bfloat16)                                 # [ROWS, H]
        # adj_ref[0, i] is [2*ROWS, ROWS] block-diagonal:
        #   rows [0:ROWS)      -> 'self' weights (residual path)
        #   rows [ROWS:2*ROWS) -> 'ppi' weights
        a = adj_ref[0, i]                                           # [2*ROWS, ROWS] bf16
        both = jnp.dot(a, hb, preferred_element_type=jnp.float32)   # [2*ROWS, H] f32
        res = both[:ROWS]        # sublane-aligned split (ROWS = 128)
        agg = both[ROWS:]

        # h = relu(ppi_linear(agg)) + res    (dropout == identity)
        h = jnp.dot(agg.astype(jnp.bfloat16), w_ppi_ref[i],
                    preferred_element_type=jnp.float32)
        h = jnp.maximum(h + b_ppi_ref[i], 0.0)                      # [ROWS, H] f32
        if RESIDUAL:
            h = h + res

    # output linear (weights zero-padded to OUT_PAD lanes -> unmasked store)
    out = jnp.dot(h.astype(jnp.bfloat16), w_out_ref[...],
                  preferred_element_type=jnp.float32)
    out_ref[0] = out + b_out_ref[...]                               # [ROWS, OUT_PAD]


@jax.jit
def gcn_forward(x_stacked, adj_blk, w_in, b_in_folded, w_ppi, b_ppi,
                w_out_pad, b_out_pad):
    """x_stacked: [NUM_CHUNKS, ROWS, In]; adj_blk: [NUM_CHUNKS, G, 2*ROWS, ROWS]."""
    out_padded = pl.pallas_call(
        gcn_kernel,
        out_shape=jax.ShapeDtypeStruct((NUM_CHUNKS, ROWS, OUT_PAD), jnp.float32),
        grid=(NUM_CHUNKS,),
        in_specs=[
            # per-chunk operands
            pl.BlockSpec((1, ROWS, INPUT_SIZE), lambda c: (c, 0, 0)),
            pl.BlockSpec((1, NUM_GCN, 2 * ROWS, ROWS), lambda c: (c, 0, 0, 0)),
            # shared weights: constant block across the grid (stay resident)
            pl.BlockSpec((INPUT_SIZE, HIDDEN_SIZE), lambda c: (0, 0)),
            pl.BlockSpec((1, HIDDEN_SIZE), lambda c: (0, 0)),
            pl.BlockSpec((NUM_GCN, HIDDEN_SIZE, HIDDEN_SIZE), lambda c: (0, 0, 0)),
            pl.BlockSpec((NUM_GCN, 1, HIDDEN_SIZE), lambda c: (0, 0, 0)),
            pl.BlockSpec((HIDDEN_SIZE, OUT_PAD), lambda c: (0, 0)),
            pl.BlockSpec((1, OUT_PAD), lambda c: (0, 0)),
        ],
        out_specs=pl.BlockSpec((1, ROWS, OUT_PAD), lambda c: (c, 0, 0)),
        compiler_params=pltpu.CompilerParams(
            dimension_semantics=("parallel",)),
    )(x_stacked, adj_blk, w_in, b_in_folded, w_ppi, b_ppi, w_out_pad, b_out_pad)
    # un-stack the batch and slice the lane-padded output back to LABELS_NUM
    out = out_padded.reshape(B_GRAPHS, N_NODES, OUT_PAD)
    return out[:, :, :LABELS_NUM]


def prepare_kernel_operands(x, adj_self, adj_ppi, w_in, b_in, input_bias,
                            w_ppi, b_ppi, w_out, b_out):
    """Host-side prep: batch-stack, block-diag adjacencies, fold biases, pad."""
    # batch-stacked node features per chunk: [NUM_CHUNKS, ROWS, In]
    x_stacked = x.reshape(NUM_CHUNKS, ROWS, INPUT_SIZE).astype(jnp.bfloat16)

    def block_diag(a):  # a: [GRAPHS_PER_CHUNK, N, N] -> [ROWS, ROWS]
        out = jnp.zeros((ROWS, ROWS), jnp.float32)
        for g in range(GRAPHS_PER_CHUNK):
            out = out.at[g * N_NODES:(g + 1) * N_NODES,
                         g * N_NODES:(g + 1) * N_NODES].set(a[g])
        return out

    # [NUM_CHUNKS, G, 2*ROWS, ROWS]: rows [0:ROWS) self, rows [ROWS:2*ROWS) ppi
    chunks = []
    for c in range(NUM_CHUNKS):
        sl = slice(c * GRAPHS_PER_CHUNK, (c + 1) * GRAPHS_PER_CHUNK)
        per_layer = []
        for i in range(NUM_GCN):
            a_self = block_diag(adj_self[sl, i])
            a_ppi = block_diag(adj_ppi[sl, i])
            per_layer.append(jnp.concatenate([a_self, a_ppi], axis=0))
        chunks.append(jnp.stack(per_layer))
    adj_blk = jnp.stack(chunks).astype(jnp.bfloat16)

    b_in_folded = (b_in + input_bias).astype(jnp.float32)            # [1, H]
    w_out_pad = jnp.zeros((HIDDEN_SIZE, OUT_PAD), jnp.float32)
    w_out_pad = w_out_pad.at[:, :LABELS_NUM].set(w_out).astype(jnp.bfloat16)
    b_out_pad = jnp.zeros((1, OUT_PAD), jnp.float32).at[:, :LABELS_NUM].set(b_out)

    return (x_stacked, adj_blk, w_in.astype(jnp.bfloat16), b_in_folded,
            w_ppi.astype(jnp.bfloat16), b_ppi.astype(jnp.float32),
            w_out_pad, b_out_pad)


def gcn_reference(x, adj_self, adj_ppi, w_in, b_in, input_bias,
                  w_ppi, b_ppi, w_out, b_out):
    """Pure-JAX f32 reference mirroring the PyTorch forward (dropout = identity)."""
    def single(xg, a_self_g, a_ppi_g):
        h = jax.nn.relu(xg @ w_in + b_in + input_bias)
        for i in range(NUM_GCN):
            res = a_self_g[i] @ h
            agg = a_ppi_g[i] @ h
            h = jax.nn.relu(agg @ w_ppi[i] + b_ppi[i])
            if RESIDUAL:
                h = h + res
        return h @ w_out + b_out
    return jax.vmap(single)(x, adj_self, adj_ppi)


def xavier_uniform(key, fan_in, fan_out):
    bound = jnp.sqrt(6.0 / (fan_in + fan_out))
    # stored as [in, out] (transpose of PyTorch [out, in]); xavier bound is
    # symmetric in fan_in/fan_out so this matches nn.init.xavier_uniform_.
    return jax.random.uniform(key, (fan_in, fan_out), jnp.float32, -bound, bound)


def linear_bias(key, fan_in, fan_out):
    bound = 1.0 / jnp.sqrt(fan_in)
    return jax.random.uniform(key, (1, fan_out), jnp.float32, -bound, bound)


if __name__ == "__main__":
    key = jax.random.PRNGKey(0)
    keys = jax.random.split(key, 16)

    # batched node features: B graphs of N nodes each
    x = jax.random.normal(keys[0], (B_GRAPHS, N_NODES, INPUT_SIZE), jnp.float32)

    # input linear + extra input_bias parameter
    w_in = xavier_uniform(keys[1], INPUT_SIZE, HIDDEN_SIZE)
    b_in = linear_bias(keys[2], INPUT_SIZE, HIDDEN_SIZE)
    input_bias = jnp.zeros((1, HIDDEN_SIZE), jnp.float32)  # nn.Parameter(zeros)

    # per-layer ppi linears
    w_ppi = jnp.stack([xavier_uniform(keys[3 + i], HIDDEN_SIZE, HIDDEN_SIZE)
                       for i in range(NUM_GCN)])                      # [G, H, H]
    b_ppi = jnp.stack([linear_bias(keys[5 + i], HIDDEN_SIZE, HIDDEN_SIZE)
                       for i in range(NUM_GCN)])                      # [G, 1, H]

    # output linear
    w_out = xavier_uniform(keys[7], HIDDEN_SIZE, LABELS_NUM)
    b_out = linear_bias(keys[8], HIDDEN_SIZE, LABELS_NUM)

    # dense per-graph, per-layer edge-weight matrices standing in for DGL blocks:
    # adj_*[graph, layer, dst, src] = edge weight ('self' / 'ppi'), sparse-ish.
    def make_adj(k, density):
        kw, km = jax.random.split(k)
        shape = (B_GRAPHS, NUM_GCN, N_NODES, N_NODES)
        w = jax.random.uniform(kw, shape, jnp.float32)
        mask = jax.random.bernoulli(km, density, shape)
        return (w * mask).astype(jnp.float32)

    adj_ppi = make_adj(keys[9], 0.3)
    adj_self = make_adj(keys[10], 0.2)

    # host-side stacking / block-diag fusion / folding / lane-padding
    operands = prepare_kernel_operands(x, adj_self, adj_ppi, w_in, b_in,
                                       input_bias, w_ppi, b_ppi, w_out, b_out)

    out = gcn_forward(*operands)
    jax.block_until_ready(out)

    ref = gcn_reference(x, adj_self, adj_ppi, w_in, b_in, input_bias,
                        w_ppi, b_ppi, w_out, b_out)
    assert out.shape == (B_GRAPHS, N_NODES, LABELS_NUM)
    # bf16 matmul operands (f32 accumulation) => compare with a relative
    # max-error bound against the pure-f32 reference.
    err = float(jnp.max(jnp.abs(out - ref)))
    scale = float(jnp.max(jnp.abs(ref))) + 1e-6
    assert err <= 0.05 * scale, f"max abs err {err} vs ref scale {scale}"

    print("KERNEL_OK")
</pallas_src>

<mosaic_0001>
module attributes {stable_mosaic.version = 11 : i64} {
  func.func @gcn_kernel(%arg0: i32, %arg1: memref<1x128x16xbf16, #tpu.memory_space<vmem>>, %arg2: memref<1x2x256x128xbf16, #tpu.memory_space<vmem>>, %arg3: memref<16x32xbf16, #tpu.memory_space<vmem>>, %arg4: memref<1x32xf32, #tpu.memory_space<vmem>>, %arg5: memref<2x32x32xbf16, #tpu.memory_space<vmem>>, %arg6: memref<2x1x32xf32, #tpu.memory_space<vmem>>, %arg7: memref<32x128xbf16, #tpu.memory_space<vmem>>, %arg8: memref<1x128xf32, #tpu.memory_space<vmem>>, %arg9: memref<1x128x128xf32, #tpu.memory_space<vmem>>) attributes {dimension_semantics = [#tpu.dimension_semantics<parallel>], iteration_bounds = array<i64: 1>, scalar_prefetch = 0 : i64, scratch_operands = 0 : i64, tpu.core_type = #tpu.core_type<tc>, window_params = [{transform_indices = @transform_0, window_bounds = array<i64: 1, 128, 16>}, {transform_indices = @transform_1, window_bounds = array<i64: 1, 2, 256, 128>}, {pipeline_mode = #tpu.pipeline_mode<synchronous>, transform_indices = @transform_2, window_bounds = array<i64: 16, 32>}, {pipeline_mode = #tpu.pipeline_mode<synchronous>, transform_indices = @transform_3, window_bounds = array<i64: 1, 32>}, {pipeline_mode = #tpu.pipeline_mode<synchronous>, transform_indices = @transform_4, window_bounds = array<i64: 2, 32, 32>}, {pipeline_mode = #tpu.pipeline_mode<synchronous>, transform_indices = @transform_5, window_bounds = array<i64: 2, 1, 32>}, {pipeline_mode = #tpu.pipeline_mode<synchronous>, transform_indices = @transform_6, window_bounds = array<i64: 32, 128>}, {pipeline_mode = #tpu.pipeline_mode<synchronous>, transform_indices = @transform_7, window_bounds = array<i64: 1, 128>}, {transform_indices = @transform_8, window_bounds = array<i64: 1, 128, 128>}]} {
    %c0 = arith.constant 0 : index
    %c0_0 = arith.constant 0 : index
    %c0_1 = arith.constant 0 : index
    %0 = vector.load %arg1[%c0, %c0_0, %c0_1] : memref<1x128x16xbf16, #tpu.memory_space<vmem>>, vector<1x128x16xbf16>
    %1 = vector.shape_cast %0 : vector<1x128x16xbf16> to vector<128x16xbf16>
    %c0_2 = arith.constant 0 : index
    %c0_3 = arith.constant 0 : index
    %2 = vector.load %arg3[%c0_2, %c0_3] : memref<16x32xbf16, #tpu.memory_space<vmem>>, vector<16x32xbf16>
    %cst = arith.constant dense<0.000000e+00> : vector<128x32xf32>
    %3 = tpu.matmul %1, %2, %cst {dimension_numbers = #tpu.dot_dimension_numbers<[1], [0], [0], [1], [0, 0, 1, 1], [], []>} : vector<128x16xbf16>, vector<16x32xbf16>, vector<128x32xf32> -> vector<128x32xf32>
    %c0_4 = arith.constant 0 : index
    %c0_5 = arith.constant 0 : index
    %4 = vector.load %arg4[%c0_4, %c0_5] : memref<1x32xf32, #tpu.memory_space<vmem>>, vector<1x32xf32>
    %5 = vector.broadcast %4 : vector<1x32xf32> to vector<128x32xf32>
    %6 = arith.addf %3, %5 : vector<128x32xf32>
    %cst_6 = arith.constant 0.000000e+00 : f32
    %7 = vector.broadcast %cst_6 : f32 to vector<128x32xf32>
    %8 = arith.maximumf %6, %7 : vector<128x32xf32>
    %9 = arith.truncf %8 : vector<128x32xf32> to vector<128x32xbf16>
    %c0_7 = arith.constant 0 : index
    %c0_8 = arith.constant 0 : index
    %c0_9 = arith.constant 0 : index
    %c0_10 = arith.constant 0 : index
    %10 = vector.load %arg2[%c0_7, %c0_8, %c0_9, %c0_10] : memref<1x2x256x128xbf16, #tpu.memory_space<vmem>>, vector<1x1x256x128xbf16>
    %11 = vector.shape_cast %10 : vector<1x1x256x128xbf16> to vector<256x128xbf16>
    %cst_11 = arith.constant dense<0.000000e+00> : vector<256x32xf32>
    %12 = tpu.matmul %11, %9, %cst_11 {dimension_numbers = #tpu.dot_dimension_numbers<[1], [0], [0], [1], [0, 0, 1, 1], [], []>} : vector<256x128xbf16>, vector<128x32xbf16>, vector<256x32xf32> -> vector<256x32xf32>
    %13 = vector.extract_strided_slice %12 {offsets = [0, 0], sizes = [128, 32], strides = [1, 1]} : vector<256x32xf32> to vector<128x32xf32>
    %14 = vector.extract_strided_slice %12 {offsets = [128, 0], sizes = [128, 32], strides = [1, 1]} : vector<256x32xf32> to vector<128x32xf32>
    %15 = arith.truncf %14 : vector<128x32xf32> to vector<128x32xbf16>
    %c0_12 = arith.constant 0 : index
    %c0_13 = arith.constant 0 : index
    %c0_14 = arith.constant 0 : index
    %16 = vector.load %arg5[%c0_12, %c0_13, %c0_14] : memref<2x32x32xbf16, #tpu.memory_space<vmem>>, vector<1x32x32xbf16>
    %17 = vector.shape_cast %16 : vector<1x32x32xbf16> to vector<32x32xbf16>
    %cst_15 = arith.constant dense<0.000000e+00> : vector<128x32xf32>
    %18 = tpu.matmul %15, %17, %cst_15 {dimension_numbers = #tpu.dot_dimension_numbers<[1], [0], [0], [1], [0, 0, 1, 1], [], []>} : vector<128x32xbf16>, vector<32x32xbf16>, vector<128x32xf32> -> vector<128x32xf32>
    %c0_16 = arith.constant 0 : index
    %c0_17 = arith.constant 0 : index
    %c0_18 = arith.constant 0 : index
    %19 = vector.load %arg6[%c0_16, %c0_17, %c0_18] : memref<2x1x32xf32, #tpu.memory_space<vmem>>, vector<1x1x32xf32>
    %20 = vector.shape_cast %19 : vector<1x1x32xf32> to vector<1x32xf32>
    %21 = vector.broadcast %20 : vector<1x32xf32> to vector<128x32xf32>
    %22 = arith.addf %18, %21 : vector<128x32xf32>
    %cst_19 = arith.constant 0.000000e+00 : f32
    %23 = vector.broadcast %cst_19 : f32 to vector<128x32xf32>
    %24 = arith.maximumf %22, %23 : vector<128x32xf32>
    %25 = arith.addf %24, %13 : vector<128x32xf32>
    %26 = arith.truncf %25 : vector<128x32xf32> to vector<128x32xbf16>
    %c0_20 = arith.constant 0 : index
    %c1 = arith.constant 1 : index
    %c0_21 = arith.constant 0 : index
    %c0_22 = arith.constant 0 : index
    %27 = vector.load %arg2[%c0_20, %c1, %c0_21, %c0_22] : memref<1x2x256x128xbf16, #tpu.memory_space<vmem>>, vector<1x1x256x128xbf16>
    %28 = vector.shape_cast %27 : vector<1x1x256x128xbf16> to vector<256x128xbf16>
    %cst_23 = arith.constant dense<0.000000e+00> : vector<256x32xf32>
    %29 = tpu.matmul %28, %26, %cst_23 {dimension_numbers = #tpu.dot_dimension_numbers<[1], [0], [0], [1], [0, 0, 1, 1], [], []>} : vector<256x128xbf16>, vector<128x32xbf16>, vector<256x32xf32> -> vector<256x32xf32>
    %30 = vector.extract_strided_slice %29 {offsets = [0, 0], sizes = [128, 32], strides = [1, 1]} : vector<256x32xf32> to vector<128x32xf32>
    %31 = vector.extract_strided_slice %29 {offsets = [128, 0], sizes = [128, 32], strides = [1, 1]} : vector<256x32xf32> to vector<128x32xf32>
    %32 = arith.truncf %31 : vector<128x32xf32> to vector<128x32xbf16>
    %c1_24 = arith.constant 1 : index
    %c0_25 = arith.constant 0 : index
    %c0_26 = arith.constant 0 : index
    %33 = vector.load %arg5[%c1_24, %c0_25, %c0_26] : memref<2x32x32xbf16, #tpu.memory_space<vmem>>, vector<1x32x32xbf16>
    %34 = vector.shape_cast %33 : vector<1x32x32xbf16> to vector<32x32xbf16>
    %cst_27 = arith.constant dense<0.000000e+00> : vector<128x32xf32>
    %35 = tpu.matmul %32, %34, %cst_27 {dimension_numbers = #tpu.dot_dimension_numbers<[1], [0], [0], [1], [0, 0, 1, 1], [], []>} : vector<128x32xbf16>, vector<32x32xbf16>, vector<128x32xf32> -> vector<128x32xf32>
    %c1_28 = arith.constant 1 : index
    %c0_29 = arith.constant 0 : index
    %c0_30 = arith.constant 0 : index
    %36 = vector.load %arg6[%c1_28, %c0_29, %c0_30] : memref<2x1x32xf32, #tpu.memory_space<vmem>>, vector<1x1x32xf32>
    %37 = vector.shape_cast %36 : vector<1x1x32xf32> to vector<1x32xf32>
    %38 = vector.broadcast %37 : vector<1x32xf32> to vector<128x32xf32>
    %39 = arith.addf %35, %38 : vector<128x32xf32>
    %cst_31 = arith.constant 0.000000e+00 : f32
    %40 = vector.broadcast %cst_31 : f32 to vector<128x32xf32>
    %41 = arith.maximumf %39, %40 : vector<128x32xf32>
    %42 = arith.addf %41, %30 : vector<128x32xf32>
    %43 = arith.truncf %42 : vector<128x32xf32> to vector<128x32xbf16>
    %c0_32 = arith.constant 0 : index
    %c0_33 = arith.constant 0 : index
    %44 = vector.load %arg7[%c0_32, %c0_33] : memref<32x128xbf16, #tpu.memory_space<vmem>>, vector<32x128xbf16>
    %cst_34 = arith.constant dense<0.000000e+00> : vector<128x128xf32>
    %45 = tpu.matmul %43, %44, %cst_34 {dimension_numbers = #tpu.dot_dimension_numbers<[1], [0], [0], [1], [0, 0, 1, 1], [], []>} : vector<128x32xbf16>, vector<32x128xbf16>, vector<128x128xf32> -> vector<128x128xf32>
    %c0_35 = arith.constant 0 : index
    %c0_36 = arith.constant 0 : index
    %46 = vector.load %arg8[%c0_35, %c0_36] : memref<1x128xf32, #tpu.memory_space<vmem>>, vector<1x128xf32>
    %47 = vector.broadcast %46 : vector<1x128xf32> to vector<128x128xf32>
    %48 = arith.addf %45, %47 : vector<128x128xf32>
    %c0_37 = arith.constant 0 : index
    %c0_38 = arith.constant 0 : index
    %c0_39 = arith.constant 0 : index
    %49 = vector.load %arg9[%c0_37, %c0_38, %c0_39] : memref<1x128x128xf32, #tpu.memory_space<vmem>>, vector<1x128x128xf32>
    %50 = vector.shape_cast %49 : vector<1x128x128xf32> to vector<128x128xf32>
    %51 = vector.shape_cast %48 : vector<128x128xf32> to vector<1x128x128xf32>
    tpu.vector_store %arg9[%c0_37, %c0_38, %c0_39], %51 {strides = array<i32>} : memref<1x128x128xf32, #tpu.memory_space<vmem>>, vector<1x128x128xf32>,
    return
  }
  func.func @transform_0(%arg0: i32) -> (i32, i32, i32) {
    %c0_i32 = arith.constant 0 : i32
    %c0_i32_0 = arith.constant 0 : i32
    %c0_i32_1 = arith.constant 0 : i32
    return %arg0, %c0_i32, %c0_i32_0 : i32, i32, i32
  }
  func.func @transform_1(%arg0: i32) -> (i32, i32, i32, i32) {
    %c0_i32 = arith.constant 0 : i32
    %c0_i32_0 = arith.constant 0 : i32
    %c0_i32_1 = arith.constant 0 : i32
    %c0_i32_2 = arith.constant 0 : i32
    return %arg0, %c0_i32, %c0_i32_0, %c0_i32_1 : i32, i32, i32, i32
  }
  func.func @transform_2(%arg0: i32) -> (i32, i32) {
    %c0_i32 = arith.constant 0 : i32
    %c0_i32_0 = arith.constant 0 : i32
    %c0_i32_1 = arith.constant 0 : i32
    return %c0_i32, %c0_i32_0 : i32, i32
  }
  func.func @transform_3(%arg0: i32) -> (i32, i32) {
    %c0_i32 = arith.constant 0 : i32
    %c0_i32_0 = arith.constant 0 : i32
    %c0_i32_1 = arith.constant 0 : i32
    return %c0_i32, %c0_i32_0 : i32, i32
  }
  func.func @transform_4(%arg0: i32) -> (i32, i32, i32) {
    %c0_i32 = arith.constant 0 : i32
    %c0_i32_0 = arith.constant 0 : i32
    %c0_i32_1 = arith.constant 0 : i32
    %c0_i32_2 = arith.constant 0 : i32
    return %c0_i32, %c0_i32_0, %c0_i32_1 : i32, i32, i32
  }
  func.func @transform_5(%arg0: i32) -> (i32, i32, i32) {
    %c0_i32 = arith.constant 0 : i32
    %c0_i32_0 = arith.constant 0 : i32
    %c0_i32_1 = arith.constant 0 : i32
    %c0_i32_2 = arith.constant 0 : i32
    return %c0_i32, %c0_i32_0, %c0_i32_1 : i32, i32, i32
  }
  func.func @transform_6(%arg0: i32) -> (i32, i32) {
    %c0_i32 = arith.constant 0 : i32
    %c0_i32_0 = arith.constant 0 : i32
    %c0_i32_1 = arith.constant 0 : i32
    return %c0_i32, %c0_i32_0 : i32, i32
  }
  func.func @transform_7(%arg0: i32) -> (i32, i32) {
    %c0_i32 = arith.constant 0 : i32
    %c0_i32_0 = arith.constant 0 : i32
    %c0_i32_1 = arith.constant 0 : i32
    return %c0_i32, %c0_i32_0 : i32, i32
  }
  func.func @transform_8(%arg0: i32) -> (i32, i32, i32) {
    %c0_i32 = arith.constant 0 : i32
    %c0_i32_0 = arith.constant 0 : i32
    %c0_i32_1 = arith.constant 0 : i32
    return %arg0, %c0_i32, %c0_i32_0 : i32, i32, i32
  }
}

</mosaic_0001>

<llo_original>
// kernel: gcn_forward.1
$region0: #{gcn_forward.1}
  #allocation0 [shape = 'u32[]', space=smem, size = 0x4, offset = 0x4, fixed_abs, tag = 'smem constant byte address 0x4 - core index']
  #allocation1 [shape = 'u32[72,128]{1,0:T(1,128)}', space=vmem, size = 0x9000, scoped, tag = 'internal scratch']
  %s0 = inlined_call_operand.vmem [shape: bf16[1,128,16], index: 0, kind: input, shape index: {}]
  %s1 = inlined_call_operand.hbm [shape: bf16[1,2,256,128], index: 1, kind: input, shape index: {}]
  %s2 = inlined_call_operand.vmem [shape: bf16[16,32], index: 2, kind: input, shape index: {}]
  %s3 = inlined_call_operand.vmem [shape: f32[1,32], index: 3, kind: input, shape index: {}]
  %s4 = inlined_call_operand.vmem [shape: bf16[2,32,32], index: 4, kind: input, shape index: {}]
  %s5 = inlined_call_operand.vmem [shape: f32[2,1,32], index: 5, kind: input, shape index: {}]
  %s6 = inlined_call_operand.vmem [shape: bf16[32,128], index: 6, kind: input, shape index: {}]
  %s7 = inlined_call_operand.vmem [shape: f32[1,128], index: 7, kind: input, shape index: {}]
  %s8 = inlined_call_operand.vmem [shape: f32[1,128,128], index: 8, kind: output, shape index: {}]
  %s9 = sld [smem:[#allocation0]]
  $region46: #{gcn_forward.1} parent=0
    _
  %s11 = ssub.s32 1, %s9
  %s12 = scalar_select 0, %s11, %s9
  $region1: #{gcn_forward.1} parent=0
    #allocation2 [shape = 'u8[131072]{0}', space=vmem, size = 0x20000, scoped, tag = 'input window, operand 1, single buffered']
    #allocation3 [shape = 's32[1]{0}', space=sflag, size = 0x4, scoped, tag = 'scoped memory for gcn_forward.1']
    %13 = vsyncpa [#allocation3], 0
    // Predicated region
    $region2: #{gcn_forward.1} parent=1 // pred_check
      _
    $region3: #{gcn_forward.1} parent=1 // pred_check_branch
      %15 = sbr.rel (0) target = $region5
    $region4: #{gcn_forward.1} parent=1 // pred_region
      _
    $region5: #{gcn_forward.1} parent=1 // pred_fallthru
      _
    // Predicated region
    $region6: #{gcn_forward.1} parent=1 // pred_check
      _
    $region7: #{gcn_forward.1} parent=1 // pred_check_branch
      %17 = sbr.rel (0) target = $region9
    $region8: #{gcn_forward.1} parent=1 // pred_region
      %19 = vsyncadd [#allocation3], 0
      %s20 = sshll.u32 %s1, 4
      %s21 = int_to_ptr.hbm [resolvable:$true] %s20
      %s22 = sshll.u32 [#allocation2], 4
      %s23 = int_to_ptr.vmem [resolvable:$true] %s22
      %28 = dma.hbm_to_vmem [thread:$0]  %s21, 4096, %s23, [#allocation3], 64, 64, 4
    $region9: #{gcn_forward.1} parent=1 // pred_fallthru
      _
    // Predicated region
    $region10: #{gcn_forward.1} parent=1 // pred_check
      _
    $region11: #{gcn_forward.1} parent=1 // pred_check_branch
      %30 = sbr.rel (0) target = $region13
    $region12: #{gcn_forward.1} parent=1 // pred_region
      _
    $region13: #{gcn_forward.1} parent=1 // pred_fallthru
      _
    // Predicated region
    $region14: #{gcn_forward.1} parent=1 // pred_check
      _
    $region15: #{gcn_forward.1} parent=1 // pred_check_branch
      %32 = sbr.rel (0) target = $region17
    $region16: #{gcn_forward.1} parent=1 // pred_region
      _
    $region17: #{gcn_forward.1} parent=1 // pred_fallthru
      _
    // Predicated region
    $region18: #{gcn_forward.1} parent=1 // pred_check
      _
    $region19: #{gcn_forward.1} parent=1 // pred_check_branch
      %34 = sbr.rel (0) target = $region21
    $region20: #{gcn_forward.1} parent=1 // pred_region
      _
    $region21: #{gcn_forward.1} parent=1 // pred_fallthru
      _
    // Predicated region
    $region22: #{gcn_forward.1} parent=1 // pred_check
      _
    $region23: #{gcn_forward.1} parent=1 // pred_check_branch
      %36 = sbr.rel (0) target = $region25
    $region24: #{gcn_forward.1} parent=1 // pred_region
      _
    $region25: #{gcn_forward.1} parent=1 // pred_fallthru
      _
    // Predicated region
    $region26: #{gcn_forward.1} parent=1 // pred_check
      _
    $region27: #{gcn_forward.1} parent=1 // pred_check_branch
      %38 = sbr.rel (0) target = $region29
    $region28: #{gcn_forward.1} parent=1 // pred_region
      _
    $region29: #{gcn_forward.1} parent=1 // pred_fallthru
      _
    // Predicated region
    $region30: #{gcn_forward.1} parent=1 // pred_check
      _
    $region31: #{gcn_forward.1} parent=1 // pred_check_branch
      %40 = sbr.rel (0) target = $region33
    $region32: #{gcn_forward.1} parent=1 // pred_region
      _
    $region33: #{gcn_forward.1} parent=1 // pred_fallthru
      _
    // Predicated region
    $region34: #{gcn_forward.1} parent=1 // pred_check
      _
    $region35: #{gcn_forward.1} parent=1 // pred_check_branch
      %42 = sbr.rel (0) target = $region37
    $region36: #{gcn_forward.1} parent=1 // pred_region
      %44 = dma.done [#allocation3], 4096
    $region37: #{gcn_forward.1} parent=1 // pred_fallthru
      _
    %v46 = vld [vmem:[%s0] sm:$0xf]
    %v47 = vld [vmem:[%s0 + $0x4] sm:$0xf]
    %v48 = vld [vmem:[%s0 + $0x8] sm:$0xf]
    %v49 = vld [vmem:[%s0 + $0xc] sm:$0xf]
    %v50 = vld [vmem:[%s0 + $0x10] sm:$0xf]
    %v51 = vld [vmem:[%s0 + $0x14] sm:$0xf]
    %v52 = vld [vmem:[%s0 + $0x18] sm:$0xf]
    %v53 = vld [vmem:[%s0 + $0x1c] sm:$0xf]
    %v54 = vld [vmem:[%s0 + $0x20] sm:$0xf]
    %v55 = vld [vmem:[%s0 + $0x24] sm:$0xf]
    %v56 = vld [vmem:[%s0 + $0x28] sm:$0xf]
    %v57 = vld [vmem:[%s0 + $0x2c] sm:$0xf]
    %v58 = vld [vmem:[%s0 + $0x30] sm:$0xf]
    %v59 = vld [vmem:[%s0 + $0x34] sm:$0xf]
    %v60 = vld [vmem:[%s0 + $0x38] sm:$0xf]
    %v61 = vld [vmem:[%s0 + $0x3c] sm:$0xf]
    %v62 = vld [vmem:[%s2] sm:$0xf]
    %v63 = vld [vmem:[%s2 + $0x4] sm:$0xf]
    %v64 = vld [vmem:[%s3] sm:$0x1]
    %v66 = vperm.slane %v64, 0
    %v84 = vunpack.c.l.b16 %v46
    %v85 = vunpack.c.l.b16 %v47
    %v86 = vunpack.c.l.b16 %v48
    %v87 = vunpack.c.l.b16 %v49
    %v88 = vunpack.c.l.b16 %v50
    %v89 = vunpack.c.l.b16 %v51
    %v90 = vunpack.c.l.b16 %v52
    %v91 = vunpack.c.l.b16 %v53
    %v92 = vunpack.c.l.b16 %v54
    %v93 = vunpack.c.l.b16 %v55
    %v94 = vunpack.c.l.b16 %v56
    %v95 = vunpack.c.l.b16 %v57
    %v96 = vunpack.c.l.b16 %v58
    %v97 = vunpack.c.l.b16 %v59
    %v98 = vunpack.c.l.b16 %v60
    %v99 = vunpack.c.l.b16 %v61
    %v100 = vpack.c.b16 %v85, %v84
    %v101 = vpack.c.b16 %v87, %v86
    %v102 = vpack.c.b16 %v89, %v88
    %v103 = vpack.c.b16 %v91, %v90
    %v104 = vpack.c.b16 %v93, %v92
    %v105 = vpack.c.b16 %v95, %v94
    %v106 = vpack.c.b16 %v97, %v96
    %v107 = vpack.c.b16 %v99, %v98
    %v110 = vunpack.c.l.b16 %v62
    %v111 = vunpack.c.l.b16 %v63
    %v112 = vpack.c.b16 %v111, %v110
    %vm114 = vcmask 130048
    %v116 = vsel %vm114, %v100, 0
    %v119 = vsel %vm114, %v101, 0
    %v122 = vsel %vm114, %v102, 0
    %v125 = vsel %vm114, %v103, 0
    %v128 = vsel %vm114, %v104, 0
    %v131 = vsel %vm114, %v105, 0
    %v134 = vsel %vm114, %v106, 0
    %v137 = vsel %vm114, %v107, 0
    %139 = vmatpush.bf16.msra.mxu0 0
    %140 = vmatpush.bf16.msra.mxu0 0
    %141 = vmatpush.bf16.msra.mxu0 0
    %142 = vmatpush.bf16.msra.mxu0 0
    %143 = vmatpush.bf16.msra.mxu0 0
    %144 = vmatpush.bf16.msra.mxu0 0
    %145 = vmatpush.bf16.msra.mxu0 0
    %146 = vmatpush.bf16.msra.mxu0 %v112
    %147 = vmatmul.bf16.gmra.mxu0 %v116
    %v148 = vpop.f32.mrf.mxu0
    %v149 = vadd.f32 %v66, %v148
    %v150 = vpop.f32.mrf.mxu0
    %v151 = vadd.f32 %v66, %v150
    %152 = vmatmul.bf16.gmra.mxu0 %v119
    %v153 = vpop.f32.mrf.mxu0
    %v154 = vadd.f32 %v66, %v153
    %v155 = vpop.f32.mrf.mxu0
    %v156 = vadd.f32 %v66, %v155
    %157 = vmatmul.bf16.gmra.mxu0 %v122
    %v158 = vpop.f32.mrf.mxu0
    %v159 = vadd.f32 %v66, %v158
    %v160 = vpop.f32.mrf.mxu0
    %v161 = vadd.f32 %v66, %v160
    %162 = vmatmul.bf16.gmra.mxu0 %v125
    %v163 = vpop.f32.mrf.mxu0
    %v164 = vadd.f32 %v66, %v163
    %v165 = vpop.f32.mrf.mxu0
    %v166 = vadd.f32 %v66, %v165
    %167 = vmatmul.bf16.gmra.mxu0 %v128
    %v168 = vpop.f32.mrf.mxu0
    %v169 = vadd.f32 %v66, %v168
    %v170 = vpop.f32.mrf.mxu0
    %v171 = vadd.f32 %v66, %v170
    %172 = vmatmul.bf16.gmra.mxu0 %v131
    %v173 = vpop.f32.mrf.mxu0
    %v174 = vadd.f32 %v66, %v173
    %v175 = vpop.f32.mrf.mxu0
    %v176 = vadd.f32 %v66, %v175
    %177 = vmatmul.bf16.gmra.mxu0 %v134
    %v178 = vpop.f32.mrf.mxu0
    %v179 = vadd.f32 %v66, %v178
    %v180 = vpop.f32.mrf.mxu0
    %v181 = vadd.f32 %v66, %v180
    %182 = vmatmul.bf16.gmra.mxu0 %v137
    %v183 = vpop.f32.mrf.mxu0
    %v184 = vadd.f32 %v66, %v183
    %v185 = vpop.f32.mrf.mxu0
    %v186 = vadd.f32 %v66, %v185
    %187 = vdwg.mxu0
    %v188 = vmax.f32 %v149, 0.0
    %v189 = vmax.f32 %v151, 0.0
    %v190 = vmax.f32 %v154, 0.0
    %v191 = vmax.f32 %v156, 0.0
    %v192 = vmax.f32 %v159, 0.0
    %v193 = vmax.f32 %v161, 0.0
    %v194 = vmax.f32 %v164, 0.0
    %v195 = vmax.f32 %v166, 0.0
    %v196 = vmax.f32 %v169, 0.0
    %v197 = vmax.f32 %v171, 0.0
    %v198 = vmax.f32 %v174, 0.0
    %v199 = vmax.f32 %v176, 0.0
    %v200 = vmax.f32 %v179, 0.0
    %v201 = vmax.f32 %v181, 0.0
    %v202 = vmax.f32 %v184, 0.0
    %v203 = vmax.f32 %v186, 0.0
    %v204 = vpack.c.bf16 %v189, %v188
    %v205 = vpack.c.bf16 %v191, %v190
    %v206 = vpack.c.bf16 %v193, %v192
    %v207 = vpack.c.bf16 %v195, %v194
    %v208 = vpack.c.bf16 %v197, %v196
    %v209 = vpack.c.bf16 %v199, %v198
    %v210 = vpack.c.bf16 %v201, %v200
    %v211 = vpack.c.bf16 %v203, %v202
    %v212 = vld [vmem:[#allocation2] sm:$0xf]
    %v213 = vld [vmem:[#allocation2 + $0x4] sm:$0xf]
    %v214 = vld [vmem:[#allocation2 + $0x8] sm:$0xf]
    %v215 = vld [vmem:[#allocation2 + $0xc] sm:$0xf]
    %v216 = vld [vmem:[#allocation2 + $0x10] sm:$0xf]
    %v217 = vld [vmem:[#allocation2 + $0x14] sm:$0xf]
    %v218 = vld [vmem:[#allocation2 + $0x18] sm:$0xf]
    %v219 = vld [vmem:[#allocation2 + $0x1c] sm:$0xf]
    %v220 = vld [vmem:[#allocation2 + $0x20] sm:$0xf]
    %v221 = vld [vmem:[#allocation2 + $0x24] sm:$0xf]
    %v222 = vld [vmem:[#allocation2 + $0x28] sm:$0xf]
    %v223 = vld [vmem:[#allocation2 + $0x2c] sm:$0xf]
    %v224 = vld [vmem:[#allocation2 + $0x30] sm:$0xf]
    %v225 = vld [vmem:[#allocation2 + $0x34] sm:$0xf]
    %v226 = vld [vmem:[#allocation2 + $0x38] sm:$0xf]
    %v227 = vld [vmem:[#allocation2 + $0x3c] sm:$0xf]
    %v228 = vld [vmem:[#allocation2 + $0x40] sm:$0xf]
    %v229 = vld [vmem:[#allocation2 + $0x44] sm:$0xf]
    %v230 = vld [vmem:[#allocation2 + $0x48] sm:$0xf]
    %v231 = vld [vmem:[#allocation2 + $0x4c] sm:$0xf]
    %v232 = vld [vmem:[#allocation2 + $0x50] sm:$0xf]
    %v233 = vld [vmem:[#allocation2 + $0x54] sm:$0xf]
    %v234 = vld [vmem:[#allocation2 + $0x58] sm:$0xf]
    %v235 = vld [vmem:[#allocation2 + $0x5c] sm:$0xf]
    %v236 = vld [vmem:[#allocation2 + $0x60] sm:$0xf]
    %v237 = vld [vmem:[#allocation2 + $0x64] sm:$0xf]
    %v238 = vld [vmem:[#allocation2 + $0x68] sm:$0xf]
    %v239 = vld [vmem:[#allocation2 + $0x6c] sm:$0xf]
    %v240 = vld [vmem:[#allocation2 + $0x70] sm:$0xf]
    %v241 = vld [vmem:[#allocation2 + $0x74] sm:$0xf]
    %v242 = vld [vmem:[#allocation2 + $0x78] sm:$0xf]
    %v243 = vld [vmem:[#allocation2 + $0x7c] sm:$0xf]
    %v276 = vunpack.c.l.b16 %v212
    %v277 = vunpack.c.l.b16 %v213
    %v278 = vunpack.c.l.b16 %v214
    %v279 = vunpack.c.l.b16 %v215
    %v280 = vunpack.c.l.b16 %v216
    %v281 = vunpack.c.l.b16 %v217
    %v282 = vunpack.c.l.b16 %v218
    %v283 = vunpack.c.l.b16 %v219
    %v284 = vunpack.c.l.b16 %v220
    %v285 = vunpack.c.l.b16 %v221
    %v286 = vunpack.c.l.b16 %v222
    %v287 = vunpack.c.l.b16 %v223
    %v288 = vunpack.c.l.b16 %v224
    %v289 = vunpack.c.l.b16 %v225
    %v290 = vunpack.c.l.b16 %v226
    %v291 = vunpack.c.l.b16 %v227
    %v292 = vunpack.c.l.b16 %v228
    %v293 = vunpack.c.l.b16 %v229
    %v294 = vunpack.c.l.b16 %v230
    %v295 = vunpack.c.l.b16 %v231
    %v296 = vunpack.c.l.b16 %v232
    %v297 = vunpack.c.l.b16 %v233
    %v298 = vunpack.c.l.b16 %v234
    %v299 = vunpack.c.l.b16 %v235
    %v300 = vunpack.c.l.b16 %v236
    %v301 = vunpack.c.l.b16 %v237
    %v302 = vunpack.c.l.b16 %v238
    %v303 = vunpack.c.l.b16 %v239
    %v304 = vunpack.c.l.b16 %v240
    %v305 = vunpack.c.l.b16 %v241
    %v306 = vunpack.c.l.b16 %v242
    %v307 = vunpack.c.l.b16 %v243
    %v308 = vpack.c.b16 %v277, %v276
    %v309 = vpack.c.b16 %v279, %v278
    %v310 = vpack.c.b16 %v281, %v280
    %v311 = vpack.c.b16 %v283, %v282
    %v312 = vpack.c.b16 %v285, %v284
    %v313 = vpack.c.b16 %v287, %v286
    %v314 = vpack.c.b16 %v289, %v288
    %v315 = vpack.c.b16 %v291, %v290
    %v316 = vpack.c.b16 %v293, %v292
    %v317 = vpack.c.b16 %v295, %v294
    %v318 = vpack.c.b16 %v297, %v296
    %v319 = vpack.c.b16 %v299, %v298
    %v320 = vpack.c.b16 %v301, %v300
    %v321 = vpack.c.b16 %v303, %v302
    %v322 = vpack.c.b16 %v305, %v304
    %v323 = vpack.c.b16 %v307, %v306
    %340 = vmatpush.bf16.msra.mxu0 %v211
    %341 = vmatpush.bf16.msra.mxu0 %v210
    %342 = vmatpush.bf16.msra.mxu0 %v209
    %343 = vmatpush.bf16.msra.mxu0 %v208
    %344 = vmatpush.bf16.msra.mxu0 %v207
    %345 = vmatpush.bf16.msra.mxu0 %v206
    %346 = vmatpush.bf16.msra.mxu0 %v205
    %347 = vmatpush.bf16.msra.mxu0 %v204
    %348 = vmatmul.bf16.gmra.mxu0 %v308
    %v349 = vpop.f32.mrf.mxu0
    %v350 = vadd.f32 0.0, %v349
    %v351 = vpop.f32.mrf.mxu0
    %v352 = vadd.f32 0.0, %v351
    %353 = vmatmul.bf16.gmra.mxu0 %v309
    %v354 = vpop.f32.mrf.mxu0
    %v355 = vadd.f32 0.0, %v354
    %v356 = vpop.f32.mrf.mxu0
    %v357 = vadd.f32 0.0, %v356
    %358 = vmatmul.bf16.gmra.mxu0 %v310
    %v359 = vpop.f32.mrf.mxu0
    %v360 = vadd.f32 0.0, %v359
    %v361 = vpop.f32.mrf.mxu0
    %v362 = vadd.f32 0.0, %v361
    %363 = vmatmul.bf16.gmra.mxu0 %v311
    %v364 = vpop.f32.mrf.mxu0
    %v365 = vadd.f32 0.0, %v364
    %v366 = vpop.f32.mrf.mxu0
    %v367 = vadd.f32 0.0, %v366
    %368 = vmatmul.bf16.gmra.mxu0 %v312
    %v369 = vpop.f32.mrf.mxu0
    %v370 = vadd.f32 0.0, %v369
    %v371 = vpop.f32.mrf.mxu0
    %v372 = vadd.f32 0.0, %v371
    %373 = vmatmul.bf16.gmra.mxu0 %v313
    %v374 = vpop.f32.mrf.mxu0
    %v375 = vadd.f32 0.0, %v374
    %v376 = vpop.f32.mrf.mxu0
    %v377 = vadd.f32 0.0, %v376
    %378 = vmatmul.bf16.gmra.mxu0 %v314
    %v379 = vpop.f32.mrf.mxu0
    %v380 = vadd.f32 0.0, %v379
    %v381 = vpop.f32.mrf.mxu0
    %v382 = vadd.f32 0.0, %v381
    %383 = vmatmul.bf16.gmra.mxu0 %v315
    %v384 = vpop.f32.mrf.mxu0
    %v385 = vadd.f32 0.0, %v384
    %v386 = vpop.f32.mrf.mxu0
    %v387 = vadd.f32 0.0, %v386
    %388 = vmatmul.bf16.gmra.mxu0 %v316
    %v389 = vpop.f32.mrf.mxu0
    %v390 = vadd.f32 0.0, %v389
    %v391 = vpop.f32.mrf.mxu0
    %v392 = vadd.f32 0.0, %v391
    %393 = vmatmul.bf16.gmra.mxu0 %v317
    %v394 = vpop.f32.mrf.mxu0
    %v395 = vadd.f32 0.0, %v394
    %v396 = vpop.f32.mrf.mxu0
    %v397 = vadd.f32 0.0, %v396
    %398 = vmatmul.bf16.gmra.mxu0 %v318
    %v399 = vpop.f32.mrf.mxu0
    %v400 = vadd.f32 0.0, %v399
    %v401 = vpop.f32.mrf.mxu0
    %v402 = vadd.f32 0.0, %v401
    %403 = vmatmul.bf16.gmra.mxu0 %v319
    %v404 = vpop.f32.mrf.mxu0
    %v405 = vadd.f32 0.0, %v404
    %v406 = vpop.f32.mrf.mxu0
    %v407 = vadd.f32 0.0, %v406
    %408 = vmatmul.bf16.gmra.mxu0 %v320
    %v409 = vpop.f32.mrf.mxu0
    %v410 = vadd.f32 0.0, %v409
    %v411 = vpop.f32.mrf.mxu0
    %v412 = vadd.f32 0.0, %v411
    %413 = vmatmul.bf16.gmra.mxu0 %v321
    %v414 = vpop.f32.mrf.mxu0
    %v415 = vadd.f32 0.0, %v414
    %v416 = vpop.f32.mrf.mxu0
    %v417 = vadd.f32 0.0, %v416
    %418 = vmatmul.bf16.gmra.mxu0 %v322
    %v419 = vpop.f32.mrf.mxu0
    %v420 = vadd.f32 0.0, %v419
    %v421 = vpop.f32.mrf.mxu0
    %v422 = vadd.f32 0.0, %v421
    %423 = vmatmul.bf16.gmra.mxu0 %v323
    %v424 = vpop.f32.mrf.mxu0
    %v425 = vadd.f32 0.0, %v424
    %v426 = vpop.f32.mrf.mxu0
    %v427 = vadd.f32 0.0, %v426
    %428 = vdwg.mxu0
    %v429 = vpack.c.bf16 %v392, %v390
    %v430 = vpack.c.bf16 %v397, %v395
    %v431 = vpack.c.bf16 %v402, %v400
    %v432 = vpack.c.bf16 %v407, %v405
    %v433 = vpack.c.bf16 %v412, %v410
    %v434 = vpack.c.bf16 %v417, %v415
    %v435 = vpack.c.bf16 %v422, %v420
    %v436 = vpack.c.bf16 %v427, %v425
    %v437 = vld [vmem:[%s4] sm:$0xf]
    %v438 = vld [vmem:[%s4 + $0x4] sm:$0xf]
    %v439 = vld [vmem:[%s4 + $0x8] sm:$0xf]
    %v440 = vld [vmem:[%s4 + $0xc] sm:$0xf]
    %v441 = vld [vmem:[%s5] sm:$0x1]
    %v443 = vperm.slane %v441, 0
    %v449 = vunpack.c.l.b16 %v437
    %v450 = vunpack.c.l.b16 %v438
    %v451 = vunpack.c.l.b16 %v439
    %v452 = vunpack.c.l.b16 %v440
    %v453 = vpack.c.b16 %v450, %v449
    %v454 = vpack.c.b16 %v452, %v451
    %vm457 = vcmask 261120
    %v459 = vsel %vm457, %v429, 0
    %v462 = vsel %vm457, %v430, 0
    %v465 = vsel %vm457, %v431, 0
    %v468 = vsel %vm457, %v432, 0
    %v471 = vsel %vm457, %v433, 0
    %v474 = vsel %vm457, %v434, 0
    %v477 = vsel %vm457, %v435, 0
    %v480 = vsel %vm457, %v436, 0
    %482 = vmatpush.bf16.msra.mxu0 0
    %483 = vmatpush.bf16.msra.mxu0 0
    %484 = vmatpush.bf16.msra.mxu0 0
    %485 = vmatpush.bf16.msra.mxu0 0
    %486 = vmatpush.bf16.msra.mxu0 0
    %487 = vmatpush.bf16.msra.mxu0 0
    %488 = vmatpush.bf16.msra.mxu0 %v454
    %489 = vmatpush.bf16.msra.mxu0 %v453
    %490 = vmatmul.bf16.gmra.mxu0 %v459
    %v491 = vpop.f32.mrf.mxu0
    %v492 = vadd.f32 %v443, %v491
    %v493 = vpop.f32.mrf.mxu0
    %v494 = vadd.f32 %v443, %v493
    %495 = vmatmul.bf16.gmra.mxu0 %v462
    %v496 = vpop.f32.mrf.mxu0
    %v497 = vadd.f32 %v443, %v496
    %v498 = vpop.f32.mrf.mxu0
    %v499 = vadd.f32 %v443, %v498
    %500 = vmatmul.bf16.gmra.mxu0 %v465
    %v501 = vpop.f32.mrf.mxu0
    %v502 = vadd.f32 %v443, %v501
    %v503 = vpop.f32.mrf.mxu0
    %v504 = vadd.f32 %v443, %v503
    %505 = vmatmul.bf16.gmra.mxu0 %v468
    %v506 = vpop.f32.mrf.mxu0
    %v507 = vadd.f32 %v443, %v506
    %v508 = vpop.f32.mrf.mxu0
    %v509 = vadd.f32 %v443, %v508
    %510 = vmatmul.bf16.gmra.mxu0 %v471
    %v511 = vpop.f32.mrf.mxu0
    %v512 = vadd.f32 %v443, %v511
    %v513 = vpop.f32.mrf.mxu0
    %v514 = vadd.f32 %v443, %v513
    %515 = vmatmul.bf16.gmra.mxu0 %v474
    %v516 = vpop.f32.mrf.mxu0
    %v517 = vadd.f32 %v443, %v516
    %v518 = vpop.f32.mrf.mxu0
    %v519 = vadd.f32 %v443, %v518
    %520 = vmatmul.bf16.gmra.mxu0 %v477
    %v521 = vpop.f32.mrf.mxu0
    %v522 = vadd.f32 %v443, %v521
    %v523 = vpop.f32.mrf.mxu0
    %v524 = vadd.f32 %v443, %v523
    %525 = vmatmul.bf16.gmra.mxu0 %v480
    %v526 = vpop.f32.mrf.mxu0
    %v527 = vadd.f32 %v443, %v526
    %v528 = vpop.f32.mrf.mxu0
    %v529 = vadd.f32 %v443, %v528
    %530 = vdwg.mxu0
    %v531 = vmax.f32 %v492, 0.0
    %v532 = vmax.f32 %v494, 0.0
    %v533 = vmax.f32 %v497, 0.0
    %v534 = vmax.f32 %v499, 0.0
    %v535 = vmax.f32 %v502, 0.0
    %v536 = vmax.f32 %v504, 0.0
    %v537 = vmax.f32 %v507, 0.0
    %v538 = vmax.f32 %v509, 0.0
    %v539 = vmax.f32 %v512, 0.0
    %v540 = vmax.f32 %v514, 0.0
    %v541 = vmax.f32 %v517, 0.0
    %v542 = vmax.f32 %v519, 0.0
    %v543 = vmax.f32 %v522, 0.0
    %v544 = vmax.f32 %v524, 0.0
    %v545 = vmax.f32 %v527, 0.0
    %v546 = vmax.f32 %v529, 0.0
    %v547 = vadd.f32 %v531, %v350
    %v548 = vadd.f32 %v532, %v352
    %v549 = vadd.f32 %v533, %v355
    %v550 = vadd.f32 %v534, %v357
    %v551 = vadd.f32 %v535, %v360
    %v552 = vadd.f32 %v536, %v362
    %v553 = vadd.f32 %v537, %v365
    %v554 = vadd.f32 %v538, %v367
    %v555 = vadd.f32 %v539, %v370
    %v556 = vadd.f32 %v540, %v372
    %v557 = vadd.f32 %v541, %v375
    %v558 = vadd.f32 %v542, %v377
    %v559 = vadd.f32 %v543, %v380
    %v560 = vadd.f32 %v544, %v382
    %v561 = vadd.f32 %v545, %v385
    %v562 = vadd.f32 %v546, %v387
    %v563 = vpack.c.bf16 %v548, %v547
    %v564 = vpack.c.bf16 %v550, %v549
    %v565 = vpack.c.bf16 %v552, %v551
    %v566 = vpack.c.bf16 %v554, %v553
    %v567 = vpack.c.bf16 %v556, %v555
    %v568 = vpack.c.bf16 %v558, %v557
    %v569 = vpack.c.bf16 %v560, %v559
    %v570 = vpack.c.bf16 %v562, %v561
    %s571 = scalar_lea.vmem [#allocation2], 128
    %v572 = vld [vmem:[%s571] sm:$0xf]
    %v573 = vld [vmem:[%s571 + $0x4] sm:$0xf]
    %v574 = vld [vmem:[%s571 + $0x8] sm:$0xf]
    %v575 = vld [vmem:[%s571 + $0xc] sm:$0xf]
    %v576 = vld [vmem:[%s571 + $0x10] sm:$0xf]
    %v577 = vld [vmem:[%s571 + $0x14] sm:$0xf]
    %v578 = vld [vmem:[%s571 + $0x18] sm:$0xf]
    %v579 = vld [vmem:[%s571 + $0x1c] sm:$0xf]
    %v580 = vld [vmem:[%s571 + $0x20] sm:$0xf]
    %v581 = vld [vmem:[%s571 + $0x24] sm:$0xf]
    %v582 = vld [vmem:[%s571 + $0x28] sm:$0xf]
    %v583 = vld [vmem:[%s571 + $0x2c] sm:$0xf]
    %v584 = vld [vmem:[%s571 + $0x30] sm:$0xf]
    %v585 = vld [vmem:[%s571 + $0x34] sm:$0xf]
    %v586 = vld [vmem:[%s571 + $0x38] sm:$0xf]
    %v587 = vld [vmem:[%s571 + $0x3c] sm:$0xf]
    %v588 = vld [vmem:[%s571 + $0x40] sm:$0xf]
    %v589 = vld [vmem:[%s571 + $0x44] sm:$0xf]
    %v590 = vld [vmem:[%s571 + $0x48] sm:$0xf]
    %v591 = vld [vmem:[%s571 + $0x4c] sm:$0xf]
    %v592 = vld [vmem:[%s571 + $0x50] sm:$0xf]
    %v593 = vld [vmem:[%s571 + $0x54] sm:$0xf]
    %v594 = vld [vmem:[%s571 + $0x58] sm:$0xf]
    %v595 = vld [vmem:[%s571 + $0x5c] sm:$0xf]
    %v596 = vld [vmem:[%s571 + $0x60] sm:$0xf]
    %v597 = vld [vmem:[%s571 + $0x64] sm:$0xf]
    %v598 = vld [vmem:[%s571 + $0x68] sm:$0xf]
    %v599 = vld [vmem:[%s571 + $0x6c] sm:$0xf]
    %v600 = vld [vmem:[%s571 + $0x70] sm:$0xf]
    %v601 = vld [vmem:[%s571 + $0x74] sm:$0xf]
    %v602 = vld [vmem:[%s571 + $0x78] sm:$0xf]
    %v603 = vld [vmem:[%s571 + $0x7c] sm:$0xf]
    %v636 = vunpack.c.l.b16 %v572
    %v637 = vunpack.c.l.b16 %v573
    %v638 = vunpack.c.l.b16 %v574
    %v639 = vunpack.c.l.b16 %v575
    %v640 = vunpack.c.l.b16 %v576
    %v641 = vunpack.c.l.b16 %v577
    %v642 = vunpack.c.l.b16 %v578
    %v643 = vunpack.c.l.b16 %v579
    %v644 = vunpack.c.l.b16 %v580
    %v645 = vunpack.c.l.b16 %v581
    %v646 = vunpack.c.l.b16 %v582
    %v647 = vunpack.c.l.b16 %v583
    %v648 = vunpack.c.l.b16 %v584
    %v649 = vunpack.c.l.b16 %v585
    %v650 = vunpack.c.l.b16 %v586
    %v651 = vunpack.c.l.b16 %v587
    %v652 = vunpack.c.l.b16 %v588
    %v653 = vunpack.c.l.b16 %v589
    %v654 = vunpack.c.l.b16 %v590
    %v655 = vunpack.c.l.b16 %v591
    %v656 = vunpack.c.l.b16 %v592
    %v657 = vunpack.c.l.b16 %v593
    %v658 = vunpack.c.l.b16 %v594
    %v659 = vunpack.c.l.b16 %v595
    %v660 = vunpack.c.l.b16 %v596
    %v661 = vunpack.c.l.b16 %v597
    %v662 = vunpack.c.l.b16 %v598
    %v663 = vunpack.c.l.b16 %v599
    %v664 = vunpack.c.l.b16 %v600
    %v665 = vunpack.c.l.b16 %v601
    %v666 = vunpack.c.l.b16 %v602
    %v667 = vunpack.c.l.b16 %v603
    %v668 = vpack.c.b16 %v637, %v636
    %v669 = vpack.c.b16 %v639, %v638
    %v670 = vpack.c.b16 %v641, %v640
    %v671 = vpack.c.b16 %v643, %v642
    %v672 = vpack.c.b16 %v645, %v644
    %v673 = vpack.c.b16 %v647, %v646
    %v674 = vpack.c.b16 %v649, %v648
    %v675 = vpack.c.b16 %v651, %v650
    %v676 = vpack.c.b16 %v653, %v652
    %v677 = vpack.c.b16 %v655, %v654
    %v678 = vpack.c.b16 %v657, %v656
    %v679 = vpack.c.b16 %v659, %v658
    %v680 = vpack.c.b16 %v661, %v660
    %v681 = vpack.c.b16 %v663, %v662
    %v682 = vpack.c.b16 %v665, %v664
    %v683 = vpack.c.b16 %v667, %v666
    %700 = vmatpush.bf16.msra.mxu0 %v570
    %701 = vmatpush.bf16.msra.mxu0 %v569
    %702 = vmatpush.bf16.msra.mxu0 %v568
    %703 = vmatpush.bf16.msra.mxu0 %v567
    %704 = vmatpush.bf16.msra.mxu0 %v566
    %705 = vmatpush.bf16.msra.mxu0 %v565
    %706 = vmatpush.bf16.msra.mxu0 %v564
    %707 = vmatpush.bf16.msra.mxu0 %v563
    %708 = vmatmul.bf16.gmra.mxu0 %v668
    %v709 = vpop.f32.mrf.mxu0
    %v710 = vadd.f32 0.0, %v709
    %v711 = vpop.f32.mrf.mxu0
    %v712 = vadd.f32 0.0, %v711
    %713 = vmatmul.bf16.gmra.mxu0 %v669
    %v714 = vpop.f32.mrf.mxu0
    %v715 = vadd.f32 0.0, %v714
    %v716 = vpop.f32.mrf.mxu0
    %v717 = vadd.f32 0.0, %v716
    %718 = vmatmul.bf16.gmra.mxu0 %v670
    %v719 = vpop.f32.mrf.mxu0
    %v720 = vadd.f32 0.0, %v719
    %v721 = vpop.f32.mrf.mxu0
    %v722 = vadd.f32 0.0, %v721
    %723 = vmatmul.bf16.gmra.mxu0 %v671
    %v724 = vpop.f32.mrf.mxu0
    %v725 = vadd.f32 0.0, %v724
    %v726 = vpop.f32.mrf.mxu0
    %v727 = vadd.f32 0.0, %v726
    %728 = vmatmul.bf16.gmra.mxu0 %v672
    %v729 = vpop.f32.mrf.mxu0
    %v730 = vadd.f32 0.0, %v729
    %v731 = vpop.f32.mrf.mxu0
    %v732 = vadd.f32 0.0, %v731
    %733 = vmatmul.bf16.gmra.mxu0 %v673
    %v734 = vpop.f32.mrf.mxu0
    %v735 = vadd.f32 0.0, %v734
    %v736 = vpop.f32.mrf.mxu0
    %v737 = vadd.f32 0.0, %v736
    %738 = vmatmul.bf16.gmra.mxu0 %v674
    %v739 = vpop.f32.mrf.mxu0
    %v740 = vadd.f32 0.0, %v739
    %v741 = vpop.f32.mrf.mxu0
    %v742 = vadd.f32 0.0, %v741
    %743 = vmatmul.bf16.gmra.mxu0 %v675
    %v744 = vpop.f32.mrf.mxu0
    %v745 = vadd.f32 0.0, %v744
    %v746 = vpop.f32.mrf.mxu0
    %v747 = vadd.f32 0.0, %v746
    %748 = vmatmul.bf16.gmra.mxu0 %v676
    %v749 = vpop.f32.mrf.mxu0
    %v750 = vadd.f32 0.0, %v749
    %v751 = vpop.f32.mrf.mxu0
    %v752 = vadd.f32 0.0, %v751
    %753 = vmatmul.bf16.gmra.mxu0 %v677
    %v754 = vpop.f32.mrf.mxu0
    %v755 = vadd.f32 0.0, %v754
    %v756 = vpop.f32.mrf.mxu0
    %v757 = vadd.f32 0.0, %v756
    %758 = vmatmul.bf16.gmra.mxu0 %v678
    %v759 = vpop.f32.mrf.mxu0
    %v760 = vadd.f32 0.0, %v759
    %v761 = vpop.f32.mrf.mxu0
    %v762 = vadd.f32 0.0, %v761
    %763 = vmatmul.bf16.gmra.mxu0 %v679
    %v764 = vpop.f32.mrf.mxu0
    %v765 = vadd.f32 0.0, %v764
    %v766 = vpop.f32.mrf.mxu0
    %v767 = vadd.f32 0.0, %v766
    %768 = vmatmul.bf16.gmra.mxu0 %v680
    %v769 = vpop.f32.mrf.mxu0
    %v770 = vadd.f32 0.0, %v769
    %v771 = vpop.f32.mrf.mxu0
    %v772 = vadd.f32 0.0, %v771
    %773 = vmatmul.bf16.gmra.mxu0 %v681
    %v774 = vpop.f32.mrf.mxu0
    %v775 = vadd.f32 0.0, %v774
    %v776 = vpop.f32.mrf.mxu0
    %v777 = vadd.f32 0.0, %v776
    %778 = vmatmul.bf16.gmra.mxu0 %v682
    %v779 = vpop.f32.mrf.mxu0
    %v780 = vadd.f32 0.0, %v779
    %v781 = vpop.f32.mrf.mxu0
    %v782 = vadd.f32 0.0, %v781
    %783 = vmatmul.bf16.gmra.mxu0 %v683
    %v784 = vpop.f32.mrf.mxu0
    %v785 = vadd.f32 0.0, %v784
    %v786 = vpop.f32.mrf.mxu0
    %v787 = vadd.f32 0.0, %v786
    %788 = vdwg.mxu0
    %v789 = vpack.c.bf16 %v752, %v750
    %v790 = vpack.c.bf16 %v757, %v755
    %v791 = vpack.c.bf16 %v762, %v760
    %v792 = vpack.c.bf16 %v767, %v765
    %v793 = vpack.c.bf16 %v772, %v770
    %v794 = vpack.c.bf16 %v777, %v775
    %v795 = vpack.c.bf16 %v782, %v780
    %v796 = vpack.c.bf16 %v787, %v785
    %s797 = scalar_lea.vmem %s4, 16
    %v798 = vld [vmem:[%s797] sm:$0xf]
    %v799 = vld [vmem:[%s797 + $0x4] sm:$0xf]
    %v800 = vld [vmem:[%s797 + $0x8] sm:$0xf]
    %v801 = vld [vmem:[%s797 + $0xc] sm:$0xf]
    %s802 = scalar_lea.vmem %s5, 1
    %v803 = vld [vmem:[%s802] sm:$0x1]
    %v805 = vperm.slane %v803, 0
    %v811 = vunpack.c.l.b16 %v798
    %v812 = vunpack.c.l.b16 %v799
    %v813 = vunpack.c.l.b16 %v800
    %v814 = vunpack.c.l.b16 %v801
    %v815 = vpack.c.b16 %v812, %v811
    %v816 = vpack.c.b16 %v814, %v813
    %v820 = vsel %vm457, %v789, 0
    %v823 = vsel %vm457, %v790, 0
    %v826 = vsel %vm457, %v791, 0
    %v829 = vsel %vm457, %v792, 0
    %v832 = vsel %vm457, %v793, 0
    %v835 = vsel %vm457, %v794, 0
    %v838 = vsel %vm457, %v795, 0
    %v841 = vsel %vm457, %v796, 0
    %843 = vmatpush.bf16.msra.mxu0 0
    %844 = vmatpush.bf16.msra.mxu0 0
    %845 = vmatpush.bf16.msra.mxu0 0
    %846 = vmatpush.bf16.msra.mxu0 0
    %847 = vmatpush.bf16.msra.mxu0 0
    %848 = vmatpush.bf16.msra.mxu0 0
    %849 = vmatpush.bf16.msra.mxu0 %v816
    %850 = vmatpush.bf16.msra.mxu0 %v815
    %851 = vmatmul.bf16.gmra.mxu0 %v820
    %v852 = vpop.f32.mrf.mxu0
    %v853 = vadd.f32 %v805, %v852
    %v854 = vpop.f32.mrf.mxu0
    %v855 = vadd.f32 %v805, %v854
    %856 = vmatmul.bf16.gmra.mxu0 %v823
    %v857 = vpop.f32.mrf.mxu0
    %v858 = vadd.f32 %v805, %v857
    %v859 = vpop.f32.mrf.mxu0
    %v860 = vadd.f32 %v805, %v859
    %861 = vmatmul.bf16.gmra.mxu0 %v826
    %v862 = vpop.f32.mrf.mxu0
    %v863 = vadd.f32 %v805, %v862
    %v864 = vpop.f32.mrf.mxu0
    %v865 = vadd.f32 %v805, %v864
    %866 = vmatmul.bf16.gmra.mxu0 %v829
    %v867 = vpop.f32.mrf.mxu0
    %v868 = vadd.f32 %v805, %v867
    %v869 = vpop.f32.mrf.mxu0
    %v870 = vadd.f32 %v805, %v869
    %871 = vmatmul.bf16.gmra.mxu0 %v832
    %v872 = vpop.f32.mrf.mxu0
    %v873 = vadd.f32 %v805, %v872
    %v874 = vpop.f32.mrf.mxu0
    %v875 = vadd.f32 %v805, %v874
    %876 = vmatmul.bf16.gmra.mxu0 %v835
    %v877 = vpop.f32.mrf.mxu0
    %v878 = vadd.f32 %v805, %v877
    %v879 = vpop.f32.mrf.mxu0
    %v880 = vadd.f32 %v805, %v879
    %881 = vmatmul.bf16.gmra.mxu0 %v838
    %v882 = vpop.f32.mrf.mxu0
    %v883 = vadd.f32 %v805, %v882
    %v884 = vpop.f32.mrf.mxu0
    %v885 = vadd.f32 %v805, %v884
    %886 = vmatmul.bf16.gmra.mxu0 %v841
    %v887 = vpop.f32.mrf.mxu0
    %v888 = vadd.f32 %v805, %v887
    %v889 = vpop.f32.mrf.mxu0
    %v890 = vadd.f32 %v805, %v889
    %891 = vdwg.mxu0
    %v892 = vmax.f32 %v853, 0.0
    %v893 = vmax.f32 %v855, 0.0
    %v894 = vmax.f32 %v858, 0.0
    %v895 = vmax.f32 %v860, 0.0
    %v896 = vmax.f32 %v863, 0.0
    %v897 = vmax.f32 %v865, 0.0
    %v898 = vmax.f32 %v868, 0.0
    %v899 = vmax.f32 %v870, 0.0
    %v900 = vmax.f32 %v873, 0.0
    %v901 = vmax.f32 %v875, 0.0
    %v902 = vmax.f32 %v878, 0.0
    %v903 = vmax.f32 %v880, 0.0
    %v904 = vmax.f32 %v883, 0.0
    %v905 = vmax.f32 %v885, 0.0
    %v906 = vmax.f32 %v888, 0.0
    %v907 = vmax.f32 %v890, 0.0
    %v908 = vadd.f32 %v892, %v710
    %v909 = vadd.f32 %v893, %v712
    %v910 = vadd.f32 %v894, %v715
    %v911 = vadd.f32 %v895, %v717
    %v912 = vadd.f32 %v896, %v720
    %v913 = vadd.f32 %v897, %v722
    %v914 = vadd.f32 %v898, %v725
    %v915 = vadd.f32 %v899, %v727
    %v916 = vadd.f32 %v900, %v730
    %v917 = vadd.f32 %v901, %v732
    %v918 = vadd.f32 %v902, %v735
    %v919 = vadd.f32 %v903, %v737
    %v920 = vadd.f32 %v904, %v740
    %v921 = vadd.f32 %v905, %v742
    %v922 = vadd.f32 %v906, %v745
    %v923 = vadd.f32 %v907, %v747
    %v924 = vpack.c.bf16 %v909, %v908
    %v925 = vpack.c.bf16 %v911, %v910
    %v926 = vpack.c.bf16 %v913, %v912
    %v927 = vpack.c.bf16 %v915, %v914
    %v928 = vpack.c.bf16 %v917, %v916
    %v929 = vpack.c.bf16 %v919, %v918
    %v930 = vpack.c.bf16 %v921, %v920
    %v931 = vpack.c.bf16 %v923, %v922
    %v932 = vld [vmem:[%s6] sm:$0xf]
    %v933 = vld [vmem:[%s6 + $0x4] sm:$0xf]
    %v934 = vld [vmem:[%s6 + $0x8] sm:$0xf]
    %v935 = vld [vmem:[%s6 + $0xc] sm:$0xf]
    %v936 = vld [vmem:[%s7] sm:$0x1]
    %v938 = vperm.slane %v936, 0
    %v944 = vunpack.c.l.b16 %v932
    %v945 = vunpack.c.l.b16 %v933
    %v946 = vunpack.c.l.b16 %v934
    %v947 = vunpack.c.l.b16 %v935
    %v948 = vpack.c.b16 %v945, %v944
    %v949 = vpack.c.b16 %v947, %v946
    %v953 = vsel %vm457, %v924, 0
    %v956 = vsel %vm457, %v925, 0
    %v959 = vsel %vm457, %v926, 0
    %v962 = vsel %vm457, %v927, 0
    %v965 = vsel %vm457, %v928, 0
    %v968 = vsel %vm457, %v929, 0
    %v971 = vsel %vm457, %v930, 0
    %v974 = vsel %vm457, %v931, 0
    %976 = vmatpush.bf16.msra.mxu0 0
    %977 = vmatpush.bf16.msra.mxu0 0
    %978 = vmatpush.bf16.msra.mxu0 0
    %979 = vmatpush.bf16.msra.mxu0 0
    %980 = vmatpush.bf16.msra.mxu0 0
    %981 = vmatpush.bf16.msra.mxu0 0
    %982 = vmatpush.bf16.msra.mxu0 %v949
    %983 = vmatpush.bf16.msra.mxu0 %v948
    %984 = vmatmul.bf16.gmra.mxu0 %v953
    %v985 = vpop.f32.mrf.mxu0
    %v986 = vadd.f32 %v938, %v985
    %v987 = vpop.f32.mrf.mxu0
    %v988 = vadd.f32 %v938, %v987
    %989 = vmatmul.bf16.gmra.mxu0 %v956
    %v990 = vpop.f32.mrf.mxu0
    %v991 = vadd.f32 %v938, %v990
    %v992 = vpop.f32.mrf.mxu0
    %v993 = vadd.f32 %v938, %v992
    %994 = vmatmul.bf16.gmra.mxu0 %v959
    %v995 = vpop.f32.mrf.mxu0
    %v996 = vadd.f32 %v938, %v995
    %v997 = vpop.f32.mrf.mxu0
    %v998 = vadd.f32 %v938, %v997
    %999 = vmatmul.bf16.gmra.mxu0 %v962
    %v1000 = vpop.f32.mrf.mxu0
    %v1001 = vadd.f32 %v938, %v1000
    %v1002 = vpop.f32.mrf.mxu0
    %v1003 = vadd.f32 %v938, %v1002
    %1004 = vmatmul.bf16.gmra.mxu0 %v965
    %v1005 = vpop.f32.mrf.mxu0
    %v1006 = vadd.f32 %v938, %v1005
    %v1007 = vpop.f32.mrf.mxu0
    %v1008 = vadd.f32 %v938, %v1007
    %1009 = vmatmul.bf16.gmra.mxu0 %v968
    %v1010 = vpop.f32.mrf.mxu0
    %v1011 = vadd.f32 %v938, %v1010
    %v1012 = vpop.f32.mrf.mxu0
    %v1013 = vadd.f32 %v938, %v1012
    %1014 = vmatmul.bf16.gmra.mxu0 %v971
    %v1015 = vpop.f32.mrf.mxu0
    %v1016 = vadd.f32 %v938, %v1015
    %v1017 = vpop.f32.mrf.mxu0
    %v1018 = vadd.f32 %v938, %v1017
    %1019 = vmatmul.bf16.gmra.mxu0 %v974
    %v1020 = vpop.f32.mrf.mxu0
    %v1021 = vadd.f32 %v938, %v1020
    %v1022 = vpop.f32.mrf.mxu0
    %v1023 = vadd.f32 %v938, %v1022
    %1024 = vdwg.mxu0
    %1025 = vst [vmem:[%s8] sm:$0xff] %v986
    %1026 = vst [vmem:[%s8 + $0x8] sm:$0xff] %v988
    %1027 = vst [vmem:[%s8 + $0x10] sm:$0xff] %v991
    %1028 = vst [vmem:[%s8 + $0x18] sm:$0xff] %v993
    %1029 = vst [vmem:[%s8 + $0x20] sm:$0xff] %v996
    %1030 = vst [vmem:[%s8 + $0x28] sm:$0xff] %v998
    %1031 = vst [vmem:[%s8 + $0x30] sm:$0xff] %v1001
    %1032 = vst [vmem:[%s8 + $0x38] sm:$0xff] %v1003
    %1033 = vst [vmem:[%s8 + $0x40] sm:$0xff] %v1006
    %1034 = vst [vmem:[%s8 + $0x48] sm:$0xff] %v1008
    %1035 = vst [vmem:[%s8 + $0x50] sm:$0xff] %v1011
    %1036 = vst [vmem:[%s8 + $0x58] sm:$0xff] %v1013
    %1037 = vst [vmem:[%s8 + $0x60] sm:$0xff] %v1016
    %1038 = vst [vmem:[%s8 + $0x68] sm:$0xff] %v1018
    %1039 = vst [vmem:[%s8 + $0x70] sm:$0xff] %v1021
    %1040 = vst [vmem:[%s8 + $0x78] sm:$0xff] %v1023
    // Predicated region
    $region38: #{gcn_forward.1} parent=1 // pred_check
      _
    $region39: #{gcn_forward.1} parent=1 // pred_check_branch
      %1042 = sbr.rel (0) target = $region41
    $region40: #{gcn_forward.1} parent=1 // pred_region
      _
    $region41: #{gcn_forward.1} parent=1 // pred_fallthru
      _
    // Predicated region
    $region42: #{gcn_forward.1} parent=1 // pred_check
      _
    $region43: #{gcn_forward.1} parent=1 // pred_check_branch
      %1044 = sbr.rel (0) target = $region45
    $region44: #{gcn_forward.1} parent=1 // pred_region
      _
    $region45: #{gcn_forward.1} parent=1 // pred_fallthru
      _
    %1045 = vsyncpa [#allocation3], 1

</llo_original>
